<compile_context>
chip_gen: v7x
topology: tpu7x:2x2x1
jax: 0.10.0
libtpu: 0.0.40
codegen_flags: <defaults>
</compile_context>

<pallas_src>
import functools

import jax
import jax.numpy as jnp
from jax.experimental import pallas as pl
from jax.experimental.pallas import tpu as pltpu


def _dis_embed_att_kernel(x_ref, w1_ref, b1_ref, w2_ref, b2_ref, o_ref):
    # x_ref : (TB, E)  VMEM batch tile
    # w1_ref: (E,  H)  full fc1 weight (pre-transposed), VMEM-resident
    # b1_ref: (1,  H)
    # w2_ref: (1,  H)  fc2 weight in native row layout
    # b2_ref: (1,  1)
    # o_ref : (TB, 1)
    h = jnp.dot(x_ref[...], w1_ref[...], preferred_element_type=jnp.float32)
    h = h + b1_ref[...]
    h = jnp.maximum(h, 0.2 * h)                       # LeakyReLU(0.2) on the VPU
    # fc2 with a single output feature: VPU mul + XLU lane reduction instead of
    # an N=1 MXU matmul (frees the MXU / result FIFO, overlaps with fc1).
    y = jnp.sum(h * w2_ref[...], axis=-1, keepdims=True)
    o_ref[...] = (y + b2_ref[...]).astype(o_ref.dtype)


@functools.partial(jax.jit, static_argnames=("block_b",))
def _dis_embed_att_call(x, w1_t, b1, w2, b2, *, block_b):
    B, E = x.shape
    _, H = w1_t.shape
    grid = (pl.cdiv(B, block_b),)                     # ragged last block is masked

    # Rough per-row VMEM footprint (f32, lane-padded 48->128 and 64->128):
    #   x double-buffered (2*512 B) + out double-buffered (2*512 B)
    #   + h / intermediates (~512 B)  ~= 2.5 KiB / row.
    # Floor at 16 MiB (don't starve the compiler), cap at 48 MiB (below v7x's
    # 64 MiB/TC physical VMEM; v5e/v6e have 128 MiB).
    vmem_limit = int(block_b * 2560 * 1.5) + (2 << 20)
    vmem_limit = min(max(vmem_limit, 16 << 20), 48 << 20)

    cost = pl.CostEstimate(
        flops=2 * B * E * H + 3 * B * H,              # fc1 matmul + lrelu + fc2 reduce
        transcendentals=0,
        bytes_accessed=B * E * 4 + E * H * 4 + B * 4,
    )

    return pl.pallas_call(
        _dis_embed_att_kernel,
        out_shape=jax.ShapeDtypeStruct((B, 1), jnp.float32),
        grid_spec=pltpu.PrefetchScalarGridSpec(
            num_scalar_prefetch=0,
            grid=grid,
            in_specs=[
                pl.BlockSpec((block_b, E), lambda i: (i, 0)),  # x batch tile
                pl.BlockSpec((E, H), lambda i: (0, 0)),        # fc1 weight (resident)
                pl.BlockSpec((1, H), lambda i: (0, 0)),        # fc1 bias
                pl.BlockSpec((1, H), lambda i: (0, 0)),        # fc2 weight (native layout)
                pl.BlockSpec((1, 1), lambda i: (0, 0)),        # fc2 bias
            ],
            out_specs=pl.BlockSpec((block_b, 1), lambda i: (i, 0)),
        ),
        compiler_params=pltpu.CompilerParams(
            # Independent batch tiles -> shard grid across both v7x TensorCores
            # (near-zero effect on single-TC v5e/v6e, but harmless).
            dimension_semantics=("parallel",),
            vmem_limit_bytes=vmem_limit,
        ),
        cost_estimate=cost,
    )(x, w1_t, b1.reshape(1, H), w2.reshape(1, H), b2.reshape(1, 1))


def dis_embed_att_forward(x, w1, b1, w2, b2, *, block_b=None):
    """Forward pass of My_Dis_Embed_Att.

    x : (B, embedSize + attSize) float32
    w1: (nhF, embedSize + attSize)  -- PyTorch Linear layout
    b1: (nhF,)
    w2: (1, nhF)
    b2: (1,)
    Returns (B, 1) float32.
    """
    B, _ = x.shape

    if block_b is None:
        # Large tiles amortize the ~0.35us per-grid-step pipeline overhead and
        # keep the HBM pipe full.  8192 lane-padded f32 rows of x/h/out is
        # ~20-30 MiB of VMEM -- safe on every generation with the raised
        # scoped limit above.  Small B => a single grid step.
        block_b = min(B, 8192)
    block_b = max(8, -(-block_b // 8) * 8)            # round up to sublane multiple

    # No jnp.pad: grid = cdiv(B, block_b); Pallas masks the ragged last
    # block's output writes, and rows are independent so the garbage rows
    # read by the boundary tile never contaminate valid outputs.
    return _dis_embed_att_call(x, w1.T, b1, w2, b2, block_b=block_b)


def init_params(key, in_dim, nhf):
    # weights_init: Linear weight ~ N(0, 0.02), bias = 0.
    k1, k2 = jax.random.split(key)
    w1 = 0.02 * jax.random.normal(k1, (nhf, in_dim), jnp.float32)
    b1 = jnp.zeros((nhf,), jnp.float32)
    w2 = 0.02 * jax.random.normal(k2, (1, nhf), jnp.float32)
    b2 = jnp.zeros((1,), jnp.float32)
    return w1, b1, w2, b2


def reference_forward(x, w1, b1, w2, b2):
    h = x @ w1.T + b1
    h = jnp.where(h >= 0, h, 0.2 * h)
    return h @ w2.T + b2


if __name__ == "__main__":
    # Small shapes consistent with the module:
    # opt.embedSize=32, opt.attSize=16, opt.nhF=64, batch=16.
    EMBED, ATT, NHF, B = 32, 16, 64, 16
    IN_DIM = EMBED + ATT

    key = jax.random.PRNGKey(0)
    kx, kp = jax.random.split(key)

    x = jax.random.normal(kx, (B, IN_DIM), jnp.float32)
    w1, b1, w2, b2 = init_params(kp, IN_DIM, NHF)

    # Default heuristic -> single grid step for this tiny batch.
    out = dis_embed_att_forward(x, w1, b1, w2, b2)
    out = jax.block_until_ready(out)

    ref = reference_forward(x, w1, b1, w2, b2)
    assert out.shape == (B, 1)
    assert jnp.allclose(out, ref, atol=1e-5, rtol=1e-5)

    # Exercise the ragged-grid (unpadded cdiv) path as well: block_b=8, B=16
    # is exact; also check a non-divisible batch.
    x2 = jax.random.normal(kx, (B + 3, IN_DIM), jnp.float32)
    out2 = jax.block_until_ready(
        dis_embed_att_forward(x2, w1, b1, w2, b2, block_b=8))
    ref2 = reference_forward(x2, w1, b1, w2, b2)
    assert out2.shape == (B + 3, 1)
    assert jnp.allclose(out2, ref2, atol=1e-5, rtol=1e-5)

    print("KERNEL_OK")
</pallas_src>

<mosaic_0001>
module attributes {stable_mosaic.version = 11 : i64} {
  func.func @_dis_embed_att_kernel(%arg0: i32, %arg1: memref<16x48xf32, #tpu.memory_space<vmem>>, %arg2: memref<48x64xf32, #tpu.memory_space<vmem>>, %arg3: memref<1x64xf32, #tpu.memory_space<vmem>>, %arg4: memref<1x64xf32, #tpu.memory_space<vmem>>, %arg5: memref<1x1xf32, #tpu.memory_space<vmem>>, %arg6: memref<16x1xf32, #tpu.memory_space<vmem>>) attributes {dimension_semantics = [#tpu.dimension_semantics<parallel>], iteration_bounds = array<i64: 1>, scalar_prefetch = 0 : i64, scratch_operands = 0 : i64, tpu.core_type = #tpu.core_type<tc>, window_params = [{transform_indices = @transform_0, window_bounds = array<i64: 16, 48>}, {pipeline_mode = #tpu.pipeline_mode<synchronous>, transform_indices = @transform_1, window_bounds = array<i64: 48, 64>}, {pipeline_mode = #tpu.pipeline_mode<synchronous>, transform_indices = @transform_2, window_bounds = array<i64: 1, 64>}, {pipeline_mode = #tpu.pipeline_mode<synchronous>, transform_indices = @transform_3, window_bounds = array<i64: 1, 64>}, {pipeline_mode = #tpu.pipeline_mode<synchronous>, transform_indices = @transform_4, window_bounds = array<i64: 1, 1>}, {transform_indices = @transform_5, window_bounds = array<i64: 16, 1>}]} {
    %c0 = arith.constant 0 : index
    %c0_0 = arith.constant 0 : index
    %0 = vector.load %arg1[%c0, %c0_0] : memref<16x48xf32, #tpu.memory_space<vmem>>, vector<16x48xf32>
    %c0_1 = arith.constant 0 : index
    %c0_2 = arith.constant 0 : index
    %1 = vector.load %arg2[%c0_1, %c0_2] : memref<48x64xf32, #tpu.memory_space<vmem>>, vector<48x64xf32>
    %cst = arith.constant dense<0.000000e+00> : vector<16x64xf32>
    %2 = tpu.matmul %0, %1, %cst {dimension_numbers = #tpu.dot_dimension_numbers<[1], [0], [0], [1], [0, 0, 1, 1], [], []>} : vector<16x48xf32>, vector<48x64xf32>, vector<16x64xf32> -> vector<16x64xf32>
    %c0_3 = arith.constant 0 : index
    %c0_4 = arith.constant 0 : index
    %3 = vector.load %arg3[%c0_3, %c0_4] : memref<1x64xf32, #tpu.memory_space<vmem>>, vector<1x64xf32>
    %4 = vector.broadcast %3 : vector<1x64xf32> to vector<16x64xf32>
    %5 = arith.addf %2, %4 : vector<16x64xf32>
    %cst_5 = arith.constant 2.000000e-01 : f32
    %6 = vector.broadcast %cst_5 : f32 to vector<16x64xf32>
    %7 = arith.mulf %6, %5 : vector<16x64xf32>
    %8 = arith.maximumf %5, %7 : vector<16x64xf32>
    %c0_6 = arith.constant 0 : index
    %c0_7 = arith.constant 0 : index
    %9 = vector.load %arg4[%c0_6, %c0_7] : memref<1x64xf32, #tpu.memory_space<vmem>>, vector<1x64xf32>
    %10 = vector.broadcast %9 : vector<1x64xf32> to vector<16x64xf32>
    %11 = arith.mulf %8, %10 : vector<16x64xf32>
    %cst_8 = arith.constant dense<0.000000e+00> : vector<16xf32>
    %12 = vector.multi_reduction <add>, %11, %cst_8 [1] : vector<16x64xf32> to vector<16xf32>
    %13 = vector.shape_cast %12 : vector<16xf32> to vector<16x1xf32>
    %c0_9 = arith.constant 0 : index
    %c0_10 = arith.constant 0 : index
    %14 = vector.load %arg5[%c0_9, %c0_10] : memref<1x1xf32, #tpu.memory_space<vmem>>, vector<1x1xf32>
    %15 = vector.broadcast %14 : vector<1x1xf32> to vector<16x1xf32>
    %16 = arith.addf %13, %15 : vector<16x1xf32>
    %c0_11 = arith.constant 0 : index
    %c0_12 = arith.constant 0 : index
    %17 = vector.load %arg6[%c0_11, %c0_12] : memref<16x1xf32, #tpu.memory_space<vmem>>, vector<16x1xf32>
    tpu.vector_store %arg6[%c0_11, %c0_12], %16 {strides = array<i32>} : memref<16x1xf32, #tpu.memory_space<vmem>>, vector<16x1xf32>,
    return
  }
  func.func @transform_0(%arg0: i32) -> (i32, i32) {
    %c0_i32 = arith.constant 0 : i32
    %c0_i32_0 = arith.constant 0 : i32
    return %arg0, %c0_i32 : i32, i32
  }
  func.func @transform_1(%arg0: i32) -> (i32, i32) {
    %c0_i32 = arith.constant 0 : i32
    %c0_i32_0 = arith.constant 0 : i32
    %c0_i32_1 = arith.constant 0 : i32
    return %c0_i32, %c0_i32_0 : i32, i32
  }
  func.func @transform_2(%arg0: i32) -> (i32, i32) {
    %c0_i32 = arith.constant 0 : i32
    %c0_i32_0 = arith.constant 0 : i32
    %c0_i32_1 = arith.constant 0 : i32
    return %c0_i32, %c0_i32_0 : i32, i32
  }
  func.func @transform_3(%arg0: i32) -> (i32, i32) {
    %c0_i32 = arith.constant 0 : i32
    %c0_i32_0 = arith.constant 0 : i32
    %c0_i32_1 = arith.constant 0 : i32
    return %c0_i32, %c0_i32_0 : i32, i32
  }
  func.func @transform_4(%arg0: i32) -> (i32, i32) {
    %c0_i32 = arith.constant 0 : i32
    %c0_i32_0 = arith.constant 0 : i32
    %c0_i32_1 = arith.constant 0 : i32
    return %c0_i32, %c0_i32_0 : i32, i32
  }
  func.func @transform_5(%arg0: i32) -> (i32, i32) {
    %c0_i32 = arith.constant 0 : i32
    %c0_i32_0 = arith.constant 0 : i32
    return %arg0, %c0_i32 : i32, i32
  }
}

</mosaic_0001>

<llo_original>
// kernel: _dis_embed_att_call.1
$region0: #{_dis_embed_att_call.1}
  #allocation0 [shape = 'u32[]', space=smem, size = 0x4, offset = 0x4, fixed_abs, tag = 'smem constant byte address 0x4 - core index']
  #allocation1 [shape = 'u32[144,128]{1,0:T(1,128)}', space=vmem, size = 0x12000, scoped, tag = 'internal scratch']
  #allocation2 [shape = 'f32[1,1]{1,0:T(1,128)S(1)}', space=vmem, size = 0x200, scoped, tag = 'scoped memory for _dis_embed_att_call.1']
  %s0 = inlined_call_operand.hbm [shape: f32[16,48], index: 0, kind: input, shape index: {}]
  %s1 = inlined_call_operand.hbm [shape: f32[48,64], index: 1, kind: input, shape index: {}]
  %s2 = inlined_call_operand.vmem [shape: f32[1,64], index: 2, kind: input, shape index: {}]
  %s3 = inlined_call_operand.vmem [shape: f32[1,64], index: 3, kind: input, shape index: {}]
  %s4 = inlined_call_operand.<no memory space> [shape: f32[1,1], index: 4, kind: input, shape index: {}]
  %s5 = inlined_call_operand.vmem [shape: f32[16,1], index: 5, kind: output, shape index: {}]
  %s6 = sld [smem:[#allocation0]]
  $region38: #{_dis_embed_att_call.1} parent=0
    _
  %s8 = ssub.s32 1, %s6
  %s9 = scalar_select 0, %s8, %s6
  %v10 = vstv %s4
  %11 = vst [vmem:[#allocation2] sm:$0x1] %v10
  $region1: #{_dis_embed_att_call.1} parent=0
    #allocation3 [shape = 'u8[8192]{0}', space=vmem, size = 0x2000, scoped, tag = 'input window, operand 0, single buffered']
    #allocation4 [shape = 's32[1]{0}', space=sflag, size = 0x4, scoped, tag = 'scoped memory for _dis_embed_att_call.1']
    #allocation5 [shape = 'u8[24576]{0}', space=vmem, size = 0x6000, scoped, tag = 'input window, operand 1, single buffered']
    #allocation6 [shape = 's32[1]{0}', space=sflag, size = 0x4, scoped, tag = 'scoped memory for _dis_embed_att_call.1']
    %12 = vsyncpa [#allocation4], 0
    %13 = vsyncpa [#allocation6], 0
    // Predicated region
    $region2: #{_dis_embed_att_call.1} parent=1 // pred_check
      _
    $region3: #{_dis_embed_att_call.1} parent=1 // pred_check_branch
      %15 = sbr.rel (0) target = $region5
    $region4: #{_dis_embed_att_call.1} parent=1 // pred_region
      %s17 = ssub.s32 256, 256
      %18 = vsyncadd [#allocation4], %s17
      %s19 = sshll.u32 [#allocation3], 4
      %s20 = int_to_ptr.vmem [resolvable:$true] %s19
      %25 = dma.hbm_to_vmem [thread:$0]  %s0, 256, %s20, [#allocation4], 128, 128, 8
    $region5: #{_dis_embed_att_call.1} parent=1 // pred_fallthru
      _
    // Predicated region
    $region6: #{_dis_embed_att_call.1} parent=1 // pred_check
      _
    $region7: #{_dis_embed_att_call.1} parent=1 // pred_check_branch
      %27 = sbr.rel (0) target = $region9
    $region8: #{_dis_embed_att_call.1} parent=1 // pred_region
      %s29 = ssub.s32 768, 768
      %30 = vsyncadd [#allocation6], %s29
      %s31 = sshll.u32 [#allocation5], 4
      %s32 = int_to_ptr.vmem [resolvable:$true] %s31
      %37 = dma.hbm_to_vmem [thread:$0]  %s1, 768, %s32, [#allocation6], 128, 128, 8
    $region9: #{_dis_embed_att_call.1} parent=1 // pred_fallthru
      _
    // Predicated region
    $region10: #{_dis_embed_att_call.1} parent=1 // pred_check
      _
    $region11: #{_dis_embed_att_call.1} parent=1 // pred_check_branch
      %39 = sbr.rel (0) target = $region13
    $region12: #{_dis_embed_att_call.1} parent=1 // pred_region
      _
    $region13: #{_dis_embed_att_call.1} parent=1 // pred_fallthru
      _
    // Predicated region
    $region14: #{_dis_embed_att_call.1} parent=1 // pred_check
      _
    $region15: #{_dis_embed_att_call.1} parent=1 // pred_check_branch
      %41 = sbr.rel (0) target = $region17
    $region16: #{_dis_embed_att_call.1} parent=1 // pred_region
      _
    $region17: #{_dis_embed_att_call.1} parent=1 // pred_fallthru
      _
    // Predicated region
    $region18: #{_dis_embed_att_call.1} parent=1 // pred_check
      _
    $region19: #{_dis_embed_att_call.1} parent=1 // pred_check_branch
      %43 = sbr.rel (0) target = $region21
    $region20: #{_dis_embed_att_call.1} parent=1 // pred_region
      _
    $region21: #{_dis_embed_att_call.1} parent=1 // pred_fallthru
      _
    // Predicated region
    $region22: #{_dis_embed_att_call.1} parent=1 // pred_check
      _
    $region23: #{_dis_embed_att_call.1} parent=1 // pred_check_branch
      %45 = sbr.rel (0) target = $region25
    $region24: #{_dis_embed_att_call.1} parent=1 // pred_region
      %46 = dma.done [#allocation4], 256
    $region25: #{_dis_embed_att_call.1} parent=1 // pred_fallthru
      _
    // Predicated region
    $region26: #{_dis_embed_att_call.1} parent=1 // pred_check
      _
    $region27: #{_dis_embed_att_call.1} parent=1 // pred_check_branch
      %48 = sbr.rel (0) target = $region29
    $region28: #{_dis_embed_att_call.1} parent=1 // pred_region
      %49 = dma.done [#allocation6], 768
    $region29: #{_dis_embed_att_call.1} parent=1 // pred_fallthru
      _
    %v50 = vld [vmem:[#allocation3] sm:$0xff]
    %v51 = vld [vmem:[#allocation3 + $0x8] sm:$0xff]
    %v52 = vld [vmem:[#allocation5] sm:$0xff]
    %v53 = vld [vmem:[#allocation5 + $0x8] sm:$0xff]
    %v54 = vld [vmem:[#allocation5 + $0x10] sm:$0xff]
    %v55 = vld [vmem:[#allocation5 + $0x18] sm:$0xff]
    %v56 = vld [vmem:[#allocation5 + $0x20] sm:$0xff]
    %v57 = vld [vmem:[#allocation5 + $0x28] sm:$0xff]
    %v58 = vld [vmem:[%s2] sm:$0x1]
    %v60 = vlaneseq
    %v61 = vshrl.u32 %v60, 7
    %v62 = vsub.s32 0, %v61
    %v63 = vrot.slane %v58, %v62
    %vm65 = vcmask 392192
    %v67 = vsel %vm65, %v50, 0
    %v70 = vsel %vm65, %v51, 0
    %72 = vmatprep.subr.mxu0 0.0
    %73 = vmatpush1.msra.mxu0 %v52
    %74 = vmatprep.subr.mxu0 0.0
    %75 = vmatpush1.msra.mxu0 %v53
    %76 = vmatprep.subr.mxu0 0.0
    %77 = vmatpush1.msra.mxu0 %v54
    %78 = vmatprep.subr.mxu0 0.0
    %79 = vmatpush1.msra.mxu0 %v55
    %80 = vmatprep.subr.mxu0 0.0
    %81 = vmatpush1.msra.mxu0 %v56
    %82 = vmatprep.subr.mxu0 0.0
    %83 = vmatpush1.msra.mxu0 %v57
    %84 = vmatprep.subr.mxu0 0.0
    %85 = vmatpush1.msra.mxu0 0.0
    %86 = vmatprep.subr.mxu0 0.0
    %87 = vmatpush1.msra.mxu0 0.0
    %88 = vmatprep.subr.mxu0 0.0
    %89 = vmatpush1.msra.mxu0 0.0
    %90 = vmatprep.subr.mxu0 0.0
    %91 = vmatpush1.msra.mxu0 0.0
    %92 = vmatprep.subr.mxu0 0.0
    %93 = vmatpush1.msra.mxu0 0.0
    %94 = vmatprep.subr.mxu0 0.0
    %95 = vmatpush1.msra.mxu0 0.0
    %96 = vmatprep.subr.mxu0 0.0
    %97 = vmatpush1.msra.mxu0 0.0
    %98 = vmatprep.subr.mxu0 0.0
    %99 = vmatpush1.msra.mxu0 0.0
    %100 = vmatprep.subr.mxu0 0.0
    %101 = vmatpush1.msra.mxu0 0.0
    %102 = vmatprep.subr.mxu0 0.0
    %103 = vmatpush1.msra.mxu0 0.0
    %104 = vmatprep.subr.mxu0 0.0
    %105 = vmatpush1.msra.mxu0 0.0
    %106 = vmatprep.subr.mxu0 0.0
    %107 = vmatpush1.msra.mxu0 0.0
    %108 = vmatprep.subr.mxu0 0.0
    %109 = vmatpush1.msra.mxu0 0.0
    %110 = vmatprep.subr.mxu0 0.0
    %111 = vmatpush1.msra.mxu0 0.0
    %112 = vmatprep.subr.mxu0 0.0
    %113 = vmatpush1.msra.mxu0 0.0
    %114 = vmatprep.subr.mxu0 0.0
    %115 = vmatpush1.msra.mxu0 0.0
    %116 = vmatprep.subr.mxu0 0.0
    %117 = vmatpush1.msra.mxu0 0.0
    %118 = vmatprep.subr.mxu0 0.0
    %119 = vmatpush1.msra.mxu0 0.0
    %120 = vmatprep.subr.mxu0 0.0
    %121 = vmatpush1.msra.mxu0 0.0
    %122 = vmatprep.subr.mxu0 0.0
    %123 = vmatpush1.msra.mxu0 0.0
    %124 = vmatprep.subr.mxu0 0.0
    %125 = vmatpush1.msra.mxu0 0.0
    %126 = vmatprep.subr.mxu0 0.0
    %127 = vmatpush1.msra.mxu0 0.0
    %128 = vmatprep.subr.mxu0 0.0
    %129 = vmatpush1.msra.mxu0 0.0
    %130 = vmatprep.subr.mxu0 0.0
    %131 = vmatpush1.msra.mxu0 0.0
    %132 = vmatprep.subr.mxu0 0.0
    %133 = vmatpush1.msra.mxu0 0.0
    %134 = vmatprep.subr.mxu0 0.0
    %135 = vmatpush1.msra.mxu0 0.0
    %136 = vmatprep.mubr.f32.mxu0 0.0
    %137 = vmatmul.mubr.f32.gmra.mrb[0].mxu0 %v67
    %v138 = vpop.f32.mrb[0].mxu0
    %v139 = vadd.f32 %v63, %v138
    %v140 = vpop.f32.mrb[0].mxu0
    %141 = vmatprep.mubr.f32.mxu0 0.0
    %142 = vmatmul.mubr.f32.gmra.mrb[0].mxu0 %v70
    %v143 = vpop.f32.mrb[0].mxu0
    %v144 = vadd.f32 %v63, %v143
    %v145 = vpop.f32.mrb[0].mxu0
    %146 = vdwg.mxu0
    %v147 = vmul.f32 %v139, 0.2
    %v148 = vmul.f32 %v144, 0.2
    %v149 = vmax.f32 %v139, %v147
    %v150 = vmax.f32 %v144, %v148
    %v151 = vld [vmem:[%s3] sm:$0x1]
    %v153 = vlaneseq
    %v154 = vshrl.u32 %v153, 7
    %v155 = vsub.s32 0, %v154
    %v156 = vrot.slane %v151, %v155
    %v158 = vmul.f32 %v149, %v156
    %v159 = vmul.f32 %v150, %v156
    %vm160 = vcmask 523264
    %v161 = vsel %vm160, %v158, 0.0
    %162 = vadd.xlane.f32.xlu0 %v161
    %v163 = vpop.xlane.xlu0 %162
    %v164 = vsel %vm160, %v159, 0.0
    %165 = vadd.xlane.f32.xlu0 %v164
    %v166 = vpop.xlane.xlu0 %165
    %v167 = vld [vmem:[#allocation2] sm:$0x1]
    %v169 = vlaneseq
    %v170 = vshrl.u32 %v169, 7
    %v171 = vsub.s32 0, %v170
    %v172 = vrot.slane %v167, %v171
    %v174 = vadd.f32 %v163, %v172
    %v175 = vadd.f32 %v166, %v172
    %vm176 = vcmask 7168
    %177 = vst.msk [vmem:[%s5] sm:$0xff] %vm176, %v174
    %178 = vst.msk [vmem:[%s5 + $0x8] sm:$0xff] %vm176, %v175
    // Predicated region
    $region30: #{_dis_embed_att_call.1} parent=1 // pred_check
      _
    $region31: #{_dis_embed_att_call.1} parent=1 // pred_check_branch
      %180 = sbr.rel (0) target = $region33
    $region32: #{_dis_embed_att_call.1} parent=1 // pred_region
      _
    $region33: #{_dis_embed_att_call.1} parent=1 // pred_fallthru
      _
    // Predicated region
    $region34: #{_dis_embed_att_call.1} parent=1 // pred_check
      _
    $region35: #{_dis_embed_att_call.1} parent=1 // pred_check_branch
      %182 = sbr.rel (0) target = $region37
    $region36: #{_dis_embed_att_call.1} parent=1 // pred_region
      _
    $region37: #{_dis_embed_att_call.1} parent=1 // pred_fallthru
      _
    %183 = vsyncpa [#allocation4], 1
    %184 = vsyncpa [#allocation6], 1

</llo_original>
